<compile_context>
chip_gen: v5e
topology: v5e:2x2
jax: 0.10.0
libtpu: 0.0.40
codegen_flags: <defaults>
</compile_context>

<pallas_src>
import functools

import jax
import jax.numpy as jnp
from jax.experimental import pallas as pl
from jax.experimental.pallas import tpu as pltpu


def _pow_int(x, g):
    """x ** g for a static non-negative integer g, via repeated multiplies (VALU)."""
    result = None
    base = x
    e = int(g)
    while e > 0:
        if e & 1:
            result = base if result is None else result * base
        e >>= 1
        if e:
            base = base * base
    if result is None:  # g == 0
        result = jnp.ones_like(x)
    return result


def _focal_loss_kernel(x_ref, t_ref, a_ref, o_ref, *, gamma, total_n, tile_n,
                       partial_sum_out):
    logits = x_ref[...].astype(jnp.float32)            # (TN, C), upcast in-kernel
    tgt = t_ref[...]                                    # (TN, 1) int32
    alpha_t = a_ref[...]                                # (TN, 1) f32 (pre-gathered)
    tn, c = logits.shape

    # Target logit via where-select + lane reduce (no f32 one-hot temp,
    # no -inf * 0 -> NaN hazard).
    cls_ids = jax.lax.broadcasted_iota(jnp.int32, (tn, c), 1)
    tgt_logit = jnp.sum(jnp.where(cls_ids == tgt, logits, 0.0),
                        axis=-1, keepdims=True)                      # (TN, 1)

    # Numerically stable logsumexp along the class (lane) axis.
    m = jnp.max(logits, axis=-1, keepdims=True)                      # (TN, 1)
    lse = m + jnp.log(jnp.sum(jnp.exp(logits - m), axis=-1, keepdims=True))

    ce = lse - tgt_logit                                             # BCE_loss
    pt = jnp.exp(-ce)
    # ce can round slightly negative -> pt slightly > 1; clamp so odd integer
    # gamma never produces a negative modulating factor.
    one_m_pt = jnp.maximum(1.0 - pt, 0.0)

    if float(gamma) == float(int(gamma)) and int(gamma) >= 0:
        mod = _pow_int(one_m_pt, int(gamma))             # VALU-only path
    else:
        # Non-integer / negative gamma: pow via EUP. pt == 1 with negative
        # gamma yields inf (same edge case as the PyTorch reference).
        mod = one_m_pt ** float(gamma)

    f_loss = alpha_t * mod * ce                          # (TN, 1)

    # Mask ragged-tail rows (beyond the real N). Keep it a select, not a
    # multiply, so garbage/NaN in padded rows cannot propagate.
    row_ids = (pl.program_id(0) * tile_n
               + jax.lax.broadcasted_iota(jnp.int32, (tn, 1), 0))
    f_loss = jnp.where(row_ids < total_n, f_loss, 0.0)

    if partial_sum_out:
        # Lane-dense (8, 128) block holding this tile's partial sum, unmasked store.
        partial = jnp.sum(f_loss, axis=0, keepdims=True)            # (1, 1)
        o_ref[...] = jnp.broadcast_to(partial, (8, 128))
    else:
        o_ref[...] = f_loss


def _vmem_caps():
    """Generation-aware VMEM budget (64 MiB/TC on v7x, 128 MiB on v5e/v6e)."""
    try:
        cap = int(pltpu.get_tpu_info().vmem_capacity_bytes)
    except Exception:
        cap = 64 * 1024 * 1024  # conservative fallback (v7x per-TensorCore)
    budget = int(cap * 0.6)                       # working-set budget for tile sizing
    limit = min(int(cap * 0.75), 100 * 1024 * 1024)
    return budget, limit


def _pick_tile_n(n, c, in_itemsize, lane_sparse_out, vmem_budget_bytes):
    """Largest row tile whose full VMEM working set fits the budget, with
    at least 2 grid steps (v7x megacore) whenever N allows."""
    n = int(n)
    if n <= 8:
        return n                                   # single block == full array dims
    c_pad = ((int(c) + 127) // 128) * 128          # lanes pad to multiples of 128
    per_row = 2 * c_pad * int(in_itemsize)         # double-buffered logits block
    per_row += 2 * 2 * 128 * 4                     # targets + alpha_t (tile_n,1), padded, x2 bufs
    per_row += 4 * c_pad * 4                       # ~4 block-sized f32/i32 intermediates
    if lane_sparse_out:
        per_row += 2 * 128 * 4                     # (tile_n, 1) per-row output block
    t = max(8, (int(vmem_budget_bytes) // per_row) // 8 * 8)
    # Guarantee >= 2 grid steps so both v7x TensorCores are used.
    half = max(8, ((-(-n // 2)) + 7) // 8 * 8)
    t = min(t, half)
    return int(t)


def focal_loss(inputs, targets, alpha=None, gamma=3, reduction="mean", tile_n=None):
    """inputs: (N, C) logits (any float dtype); targets: (N,) ints;
    alpha: None, scalar, or (C,) per-class weights."""
    n, c = inputs.shape
    t = jnp.asarray(targets, dtype=jnp.int32).reshape(n, 1)

    # alpha gather hoisted out of the kernel (4*N extra HBM bytes, negligible).
    if alpha is None:
        alpha_t = jnp.ones((n, 1), dtype=jnp.float32)
    else:
        a = jnp.asarray(alpha, dtype=jnp.float32)
        if a.ndim == 0:
            alpha_t = jnp.broadcast_to(a.reshape(1, 1), (n, 1))
        else:
            alpha_t = a.reshape(-1)[t[:, 0]].reshape(n, 1)
    alpha_t = alpha_t.astype(jnp.float32)

    partial_sum_out = reduction in ("mean", "sum")
    vmem_budget, vmem_limit = _vmem_caps()
    if tile_n is None:
        tile_n = _pick_tile_n(n, c, jnp.dtype(inputs.dtype).itemsize,
                              not partial_sum_out, vmem_budget)
    tile_n = int(tile_n)
    num_tiles = int(pl.cdiv(n, tile_n))

    kernel = functools.partial(
        _focal_loss_kernel, gamma=gamma, total_n=int(n), tile_n=tile_n,
        partial_sum_out=partial_sum_out)

    in_specs = [
        pl.BlockSpec((tile_n, c), lambda i: (i, 0)),   # logits (native dtype)
        pl.BlockSpec((tile_n, 1), lambda i: (i, 0)),   # targets
        pl.BlockSpec((tile_n, 1), lambda i: (i, 0)),   # alpha[targets]
    ]
    if partial_sum_out:
        out_shape = jax.ShapeDtypeStruct((num_tiles * 8, 128), jnp.float32)
        out_specs = pl.BlockSpec((8, 128), lambda i: (i, 0))
    else:
        out_shape = jax.ShapeDtypeStruct((num_tiles * tile_n, 1), jnp.float32)
        out_specs = pl.BlockSpec((tile_n, 1), lambda i: (i, 0))

    out = pl.pallas_call(
        kernel,
        out_shape=out_shape,
        grid_spec=pltpu.PrefetchScalarGridSpec(
            num_scalar_prefetch=0,
            grid=(num_tiles,),
            in_specs=in_specs,
            out_specs=out_specs,
        ),
        compiler_params=pltpu.CompilerParams(
            dimension_semantics=("parallel",),        # no cross-tile dependency
            vmem_limit_bytes=vmem_limit,
        ),
    )(inputs, t, alpha_t)

    if partial_sum_out:
        total = jnp.sum(out.reshape(num_tiles, 8, 128)[:, 0, 0])
        if reduction == "mean":
            return total / n
        return total
    else:  # 'none'
        return out[:n, 0]


def _focal_loss_ref(inputs, targets, alpha, gamma=3, reduction="mean"):
    """Pure-JAX reference mirroring the PyTorch forward."""
    logits = inputs.astype(jnp.float32)
    lse = jax.scipy.special.logsumexp(logits, axis=-1)
    ce = lse - jnp.take_along_axis(logits, targets[:, None], axis=-1)[:, 0]
    pt = jnp.exp(-ce)
    if alpha is None:
        alpha_t = 1.0
    else:
        a = jnp.asarray(alpha, jnp.float32)
        alpha_t = a[targets] if a.ndim else a
    f = alpha_t * (1.0 - pt) ** gamma * ce
    if reduction == "mean":
        return jnp.mean(f)
    if reduction == "sum":
        return jnp.sum(f)
    return f


if __name__ == "__main__":
    key = jax.random.PRNGKey(0)
    k_x, k_t = jax.random.split(key)

    N, C = 29, 16  # not a multiple of 8 -> exercises the ragged-tail masking
    inputs = jax.random.normal(k_x, (N, C), dtype=jnp.float32)
    targets = jax.random.randint(k_t, (N,), 0, C, dtype=jnp.int32)
    alpha = 0.25 + 0.05 * jnp.arange(C, dtype=jnp.float32)
    gamma = 3

    ref_mean = _focal_loss_ref(inputs, targets, alpha, gamma=gamma, reduction="mean")
    ref_sum = _focal_loss_ref(inputs, targets, alpha, gamma=gamma, reduction="sum")
    ref_none = _focal_loss_ref(inputs, targets, alpha, gamma=gamma, reduction="none")

    # 1) default (auto-sized tile, >= 2 grid steps, per-tile partial sums)
    out = jax.block_until_ready(focal_loss(inputs, targets, alpha, gamma=gamma))
    assert jnp.allclose(out, ref_mean, rtol=1e-5, atol=1e-6), (out, ref_mean)

    # 2) explicit multi-tile grid with ragged tail (masked rows), 'sum'
    out_sum = jax.block_until_ready(
        focal_loss(inputs, targets, alpha, gamma=gamma, reduction="sum", tile_n=8))
    assert jnp.allclose(out_sum, ref_sum, rtol=1e-5, atol=1e-6), (out_sum, ref_sum)

    # 3) reduction='none' (per-row column output path)
    out_none = jax.block_until_ready(
        focal_loss(inputs, targets, alpha, gamma=gamma, reduction="none"))
    assert jnp.allclose(out_none, ref_none, rtol=1e-5, atol=1e-6), (out_none, ref_none)

    # 4) native bf16 logits in HBM, upcast inside the kernel
    x_bf16 = inputs.astype(jnp.bfloat16)
    out_bf16 = jax.block_until_ready(focal_loss(x_bf16, targets, alpha, gamma=gamma))
    ref_bf16 = _focal_loss_ref(x_bf16.astype(jnp.float32), targets, alpha, gamma=gamma)
    assert jnp.allclose(out_bf16, ref_bf16, rtol=1e-4, atol=1e-5), (out_bf16, ref_bf16)

    print("KERNEL_OK")
</pallas_src>

<mosaic_0001>
module attributes {stable_mosaic.version = 11 : i64} {
  func.func @_focal_loss_kernel(%arg0: i32, %arg1: memref<16x16xf32, #tpu.memory_space<vmem>>, %arg2: memref<16x1xi32, #tpu.memory_space<vmem>>, %arg3: memref<16x1xf32, #tpu.memory_space<vmem>>, %arg4: memref<8x128xf32, #tpu.memory_space<vmem>>) attributes {dimension_semantics = [#tpu.dimension_semantics<parallel>], iteration_bounds = array<i64: 2>, scalar_prefetch = 0 : i64, scratch_operands = 0 : i64, tpu.core_type = #tpu.core_type<tc>, window_params = [{transform_indices = @transform_0, window_bounds = array<i64: 16, 16>}, {transform_indices = @transform_1, window_bounds = array<i64: 16, 1>}, {transform_indices = @transform_2, window_bounds = array<i64: 16, 1>}, {transform_indices = @transform_3, window_bounds = array<i64: 8, 128>}]} {
    %c0 = arith.constant 0 : index
    %c0_0 = arith.constant 0 : index
    %0 = vector.load %arg1[%c0, %c0_0] : memref<16x16xf32, #tpu.memory_space<vmem>>, vector<16x16xf32>
    %c0_1 = arith.constant 0 : index
    %c0_2 = arith.constant 0 : index
    %1 = vector.load %arg2[%c0_1, %c0_2] : memref<16x1xi32, #tpu.memory_space<vmem>>, vector<16x1xi32>
    %c0_3 = arith.constant 0 : index
    %c0_4 = arith.constant 0 : index
    %2 = vector.load %arg3[%c0_3, %c0_4] : memref<16x1xf32, #tpu.memory_space<vmem>>, vector<16x1xf32>
    %3 = tpu.iota {dimensions = array<i32: 1>} : vector<16x16xi32>
    %4 = vector.broadcast %1 : vector<16x1xi32> to vector<16x16xi32>
    %5 = arith.cmpi eq, %3, %4 : vector<16x16xi32>
    %cst = arith.constant 0.000000e+00 : f32
    %6 = vector.broadcast %cst : f32 to vector<16x16xf32>
    %7 = arith.select %5, %0, %6 : vector<16x16xi1>, vector<16x16xf32>
    %cst_5 = arith.constant dense<0.000000e+00> : vector<16xf32>
    %8 = vector.multi_reduction <add>, %7, %cst_5 [1] : vector<16x16xf32> to vector<16xf32>
    %9 = vector.shape_cast %8 : vector<16xf32> to vector<16x1xf32>
    %cst_6 = arith.constant dense<0xFF800000> : vector<16xf32>
    %10 = vector.multi_reduction <maximumf>, %0, %cst_6 [1] : vector<16x16xf32> to vector<16xf32>
    %11 = vector.shape_cast %10 : vector<16xf32> to vector<16x1xf32>
    %12 = vector.broadcast %11 : vector<16x1xf32> to vector<16x16xf32>
    %13 = arith.subf %0, %12 : vector<16x16xf32>
    %14 = math.exp %13 : vector<16x16xf32>
    %cst_7 = arith.constant dense<0.000000e+00> : vector<16xf32>
    %15 = vector.multi_reduction <add>, %14, %cst_7 [1] : vector<16x16xf32> to vector<16xf32>
    %16 = vector.shape_cast %15 : vector<16xf32> to vector<16x1xf32>
    %17 = math.log %16 : vector<16x1xf32>
    %18 = arith.addf %11, %17 : vector<16x1xf32>
    %19 = arith.subf %18, %9 : vector<16x1xf32>
    %cst_8 = arith.constant 0.000000e+00 : f32
    %20 = vector.broadcast %cst_8 : f32 to vector<16x1xf32>
    %21 = arith.subf %20, %19 : vector<16x1xf32>
    %22 = math.exp %21 : vector<16x1xf32>
    %cst_9 = arith.constant 1.000000e+00 : f32
    %23 = vector.broadcast %cst_9 : f32 to vector<16x1xf32>
    %24 = arith.subf %23, %22 : vector<16x1xf32>
    %cst_10 = arith.constant 0.000000e+00 : f32
    %25 = vector.broadcast %cst_10 : f32 to vector<16x1xf32>
    %26 = arith.maximumf %24, %25 : vector<16x1xf32>
    %27 = arith.mulf %26, %26 : vector<16x1xf32>
    %28 = arith.mulf %26, %27 : vector<16x1xf32>
    %29 = arith.mulf %2, %28 : vector<16x1xf32>
    %30 = arith.mulf %29, %19 : vector<16x1xf32>
    %c16_i32 = arith.constant 16 : i32
    %31 = arith.muli %arg0, %c16_i32 : i32
    %32 = tpu.iota {dimensions = array<i32: 0>} : vector<16x1xi32>
    %33 = vector.broadcast %31 : i32 to vector<16x1xi32>
    %34 = arith.addi %33, %32 : vector<16x1xi32>
    %c29_i32 = arith.constant 29 : i32
    %35 = vector.broadcast %c29_i32 : i32 to vector<16x1xi32>
    %36 = arith.cmpi slt, %34, %35 : vector<16x1xi32>
    %cst_11 = arith.constant 0.000000e+00 : f32
    %37 = vector.broadcast %cst_11 : f32 to vector<16x1xf32>
    %38 = arith.select %36, %30, %37 : vector<16x1xi1>, vector<16x1xf32>
    %cst_12 = arith.constant dense<0.000000e+00> : vector<1xf32>
    %39 = vector.multi_reduction <add>, %38, %cst_12 [0] : vector<16x1xf32> to vector<1xf32>
    %40 = vector.shape_cast %39 : vector<1xf32> to vector<1x1xf32>
    %41 = vector.shape_cast %40 : vector<1x1xf32> to vector<1x1xf32>
    %42 = vector.broadcast %41 : vector<1x1xf32> to vector<8x128xf32>
    %c0_13 = arith.constant 0 : index
    %c0_14 = arith.constant 0 : index
    %43 = vector.load %arg4[%c0_13, %c0_14] : memref<8x128xf32, #tpu.memory_space<vmem>>, vector<8x128xf32>
    tpu.vector_store %arg4[%c0_13, %c0_14], %42 {strides = array<i32>} : memref<8x128xf32, #tpu.memory_space<vmem>>, vector<8x128xf32>,
    return
  }
  func.func @transform_0(%arg0: i32) -> (i32, i32) {
    %c0_i32 = arith.constant 0 : i32
    %c0_i32_0 = arith.constant 0 : i32
    return %arg0, %c0_i32 : i32, i32
  }
  func.func @transform_1(%arg0: i32) -> (i32, i32) {
    %c0_i32 = arith.constant 0 : i32
    %c0_i32_0 = arith.constant 0 : i32
    return %arg0, %c0_i32 : i32, i32
  }
  func.func @transform_2(%arg0: i32) -> (i32, i32) {
    %c0_i32 = arith.constant 0 : i32
    %c0_i32_0 = arith.constant 0 : i32
    return %arg0, %c0_i32 : i32, i32
  }
  func.func @transform_3(%arg0: i32) -> (i32, i32) {
    %c0_i32 = arith.constant 0 : i32
    %c0_i32_0 = arith.constant 0 : i32
    return %arg0, %c0_i32 : i32, i32
  }
}

</mosaic_0001>

<llo_original>
// kernel: tpu_custom_call.1
$region0: #{tpu_custom_call.1}
  #allocation0 [shape = 'u32[]', space=smem, size = 0x4, offset = 0x4, fixed_abs, tag = 'smem constant byte address 0x4 - core index']
  #allocation1 [shape = 'u32[72,128]{1,0:T(1,128)}', space=vmem, size = 0x9000, scoped, tag = 'internal scratch']
  %s0 = inlined_call_operand.vmem [shape: f32[29,16], index: 0, kind: input, shape index: {}]
  %s1 = inlined_call_operand.vmem [shape: s32[29,1], index: 1, kind: input, shape index: {}]
  %s2 = inlined_call_operand.vmem [shape: f32[29,1], index: 2, kind: input, shape index: {}]
  %s3 = inlined_call_operand.hbm [shape: f32[16,128], index: 3, kind: output, shape index: {}]
  %s4 = sld [smem:[#allocation0]]
  $region45: #{tpu_custom_call.1} parent=0
    _
  %s6 = ssub.s32 1, %s4
  %s7 = scalar_select 0, %s6, %s4
  $region1: #{tpu_custom_call.1} parent=0
    #allocation2 [shape = 'u8[8192]{0}', space=vmem, size = 0x2000, scoped, tag = 'output window, operand 0']
    #allocation3 [shape = 's32[2]{0}', space=sflag, size = 0x8, scoped, tag = 'scoped memory for tpu_custom_call.1']
    %8 = vsyncpa [#allocation3], 0
    %s9 = scalar_lea.sflag [#allocation3], 1
    %10 = vsyncpa %s9, 0
    loop: start=0, step=1, limit=4
    $region2: #{tpu_custom_call.1} parent=1 // loop_pre_header
      _
    $region3: #{tpu_custom_call.1} parent=1 // loop_header
      %s12 = sphi 0, %s16
      %p13 = scmp.ge.s32.totalorder %s12, 4
      %s22 = sphi 0, %s24
      %s25 = sphi 0, %s22
      %s26 = sphi 0, %s25
      %s42 = sphi 0, %s26
      %s48 = sphi 0, %s50
      %s51 = sphi 0, %s48
      %s52 = sphi 0, %s51
      %s68 = sphi 0, %s52
      %s74 = sphi 0, %s76
      %s77 = sphi 0, %s74
      %s78 = sphi 0, %s77
      %s94 = sphi 0, %s78
      %s100 = sphi 0, %s102
      %s103 = sphi 0, %s100
      %s104 = sphi 0, %s103
      %s120 = sphi 0, %s104
    $region4: #{tpu_custom_call.1} parent=1 // loop_header_branch
      %15 = sbr.rel (%p13) target = $region8
    $region5: #{tpu_custom_call.1} parent=1 // loop_body
      %s17 = ssub.s32 %s12, 1
      %s18 = ssub.s32 %s12, 2
      %s19 = sadd.s32 %s12, 1
      %s20 = ssub.s32 %s12, %s19
      %p21 = scmp.eq.s32.totalorder %s20, 0
      %s23 = sadd.s32 %s22, 1
      %s24 = scalar_select %p21, %s22, %s23
      %p27 = pneg %p21
      %p28 = scmp.eq.s32.totalorder %s12, 1
      %p29 = por %p27, %p28
      %p30 = scmp.ne.s32.totalorder %s22, %s25
      %p31 = scmp.eq.s32.totalorder %s12, 0
      %p32 = por %p30, %p31
      %p33 = scmp.ne.s32.totalorder %s22, %s25
      %p34 = scmp.eq.s32.totalorder %s17, 1
      %p35 = por %p33, %p34
      %p36 = scmp.ne.s32.totalorder %s25, %s26
      %p37 = scmp.eq.s32.totalorder %s17, 0
      %p38 = por %p36, %p37
      %p39 = scmp.ne.s32.totalorder %s25, %s26
      %p40 = scmp.eq.s32.totalorder %s18, 1
      %p41 = por %p39, %p40
      %p43 = scmp.ne.s32.totalorder %s26, %s42
      %p44 = scmp.eq.s32.totalorder %s18, 0
      %p45 = por %p43, %p44
      %s46 = ssub.s32 %s12, %s19
      %p47 = scmp.eq.s32.totalorder %s46, 0
      %s49 = sadd.s32 %s48, 1
      %s50 = scalar_select %p47, %s48, %s49
      %p53 = pneg %p47
      %p54 = scmp.eq.s32.totalorder %s12, 1
      %p55 = por %p53, %p54
      %p56 = scmp.ne.s32.totalorder %s48, %s51
      %p57 = scmp.eq.s32.totalorder %s12, 0
      %p58 = por %p56, %p57
      %p59 = scmp.ne.s32.totalorder %s48, %s51
      %p60 = scmp.eq.s32.totalorder %s17, 1
      %p61 = por %p59, %p60
      %p62 = scmp.ne.s32.totalorder %s51, %s52
      %p63 = scmp.eq.s32.totalorder %s17, 0
      %p64 = por %p62, %p63
      %p65 = scmp.ne.s32.totalorder %s51, %s52
      %p66 = scmp.eq.s32.totalorder %s18, 1
      %p67 = por %p65, %p66
      %p69 = scmp.ne.s32.totalorder %s52, %s68
      %p70 = scmp.eq.s32.totalorder %s18, 0
      %p71 = por %p69, %p70
      %s72 = ssub.s32 %s12, %s19
      %p73 = scmp.eq.s32.totalorder %s72, 0
      %s75 = sadd.s32 %s74, 1
      %s76 = scalar_select %p73, %s74, %s75
      %p79 = pneg %p73
      %p80 = scmp.eq.s32.totalorder %s12, 1
      %p81 = por %p79, %p80
      %p82 = scmp.ne.s32.totalorder %s74, %s77
      %p83 = scmp.eq.s32.totalorder %s12, 0
      %p84 = por %p82, %p83
      %p85 = scmp.ne.s32.totalorder %s74, %s77
      %p86 = scmp.eq.s32.totalorder %s17, 1
      %p87 = por %p85, %p86
      %p88 = scmp.ne.s32.totalorder %s77, %s78
      %p89 = scmp.eq.s32.totalorder %s17, 0
      %p90 = por %p88, %p89
      %p91 = scmp.ne.s32.totalorder %s77, %s78
      %p92 = scmp.eq.s32.totalorder %s18, 1
      %p93 = por %p91, %p92
      %p95 = scmp.ne.s32.totalorder %s78, %s94
      %p96 = scmp.eq.s32.totalorder %s18, 0
      %p97 = por %p95, %p96
      %s98 = ssub.s32 %s12, %s19
      %p99 = scmp.eq.s32.totalorder %s98, 0
      %s101 = sadd.s32 %s100, 1
      %s102 = scalar_select %p99, %s100, %s101
      %p105 = pneg %p99
      %p106 = scmp.eq.s32.totalorder %s12, 1
      %p107 = por %p105, %p106
      %p108 = scmp.ne.s32.totalorder %s100, %s103
      %p109 = scmp.eq.s32.totalorder %s12, 0
      %p110 = por %p108, %p109
      %p111 = scmp.ne.s32.totalorder %s100, %s103
      %p112 = scmp.eq.s32.totalorder %s17, 1
      %p113 = por %p111, %p112
      %p114 = scmp.ne.s32.totalorder %s103, %s104
      %p115 = scmp.eq.s32.totalorder %s17, 0
      %p116 = por %p114, %p115
      %p117 = scmp.ne.s32.totalorder %s103, %s104
      %p118 = scmp.eq.s32.totalorder %s18, 1
      %p119 = por %p117, %p118
      %p121 = scmp.ne.s32.totalorder %s104, %s120
      %p122 = scmp.eq.s32.totalorder %s18, 0
      %p123 = por %p121, %p122
      %p124 = scmp.le.s32.totalorder 1, %s12
      %p125 = scmp.lt.s32.totalorder %s12, 3
      %p126 = pnand %p124, %p125
      %p127 = pneg %p126
      // Predicated region
      $region9: #{tpu_custom_call.1} parent=5 // pred_check
        _
      $region10: #{tpu_custom_call.1} parent=5 // pred_check_branch
        %129 = sbr.rel (%p126) target = $region12
      $region11: #{tpu_custom_call.1} parent=5 // pred_region
        %s130 = ssub.s32 %s12, 1
      $region12: #{tpu_custom_call.1} parent=5 // pred_fallthru
        _
      %p131 = scmp.lt.s32.totalorder %s12, 2
      // Predicated region
      $region13: #{tpu_custom_call.1} parent=5 // pred_check
        %p132 = pneg %p131
      $region14: #{tpu_custom_call.1} parent=5 // pred_check_branch
        %134 = sbr.rel (%p132) target = $region16
      $region15: #{tpu_custom_call.1} parent=5 // pred_region
        // Predicated region
        $region17: #{tpu_custom_call.1} parent=15 // pred_check
          %p135 = pneg %p32
        $region18: #{tpu_custom_call.1} parent=15 // pred_check_branch
          %137 = sbr.rel (%p135) target = $region20
        $region19: #{tpu_custom_call.1} parent=15 // pred_region
          %s138 = smul.u32 2, %s12
          %p139 = scmp.lt.s32.totalorder %s138, 3
          %s140 = scalar_select %p139, %s138, 3
          %s141 = smul.addr %s140, 8
          %s142 = scalar_lea.vmem %s0, %s141
          %s143 = smul.u32 2, %s12
        $region20: #{tpu_custom_call.1} parent=15 // pred_fallthru
          _
        // Predicated region
        $region21: #{tpu_custom_call.1} parent=15 // pred_check
          %p144 = pneg %p58
        $region22: #{tpu_custom_call.1} parent=15 // pred_check_branch
          %146 = sbr.rel (%p144) target = $region24
        $region23: #{tpu_custom_call.1} parent=15 // pred_region
          %s147 = smul.u32 2, %s12
          %p148 = scmp.lt.s32.totalorder %s147, 3
          %s149 = scalar_select %p148, %s147, 3
          %s150 = smul.addr %s149, 8
          %s151 = scalar_lea.vmem %s1, %s150
          %s152 = smul.u32 2, %s12
        $region24: #{tpu_custom_call.1} parent=15 // pred_fallthru
          _
        // Predicated region
        $region25: #{tpu_custom_call.1} parent=15 // pred_check
          %p153 = pneg %p84
        $region26: #{tpu_custom_call.1} parent=15 // pred_check_branch
          %155 = sbr.rel (%p153) target = $region28
        $region27: #{tpu_custom_call.1} parent=15 // pred_region
          %s156 = smul.u32 2, %s12
          %p157 = scmp.lt.s32.totalorder %s156, 3
          %s158 = scalar_select %p157, %s156, 3
          %s159 = smul.addr %s158, 8
          %s160 = scalar_lea.vmem %s2, %s159
          %s161 = smul.u32 2, %s12
        $region28: #{tpu_custom_call.1} parent=15 // pred_fallthru
          _
      $region16: #{tpu_custom_call.1} parent=5 // pred_fallthru
        _
      %p162 = scmp.le.s32.totalorder 1, %s12
      %p163 = scmp.lt.s32.totalorder %s12, 3
      %p164 = pnand %p162, %p163
      %p165 = pneg %p164
      // Predicated region
      $region29: #{tpu_custom_call.1} parent=5 // pred_check
        _
      $region30: #{tpu_custom_call.1} parent=5 // pred_check_branch
        %167 = sbr.rel (%p164) target = $region32
      $region31: #{tpu_custom_call.1} parent=5 // pred_region
        %s168 = ssub.s32 %s12, 1
        %s169 = smul.u32 2, %s17
        %p170 = scmp.lt.s32.totalorder %s169, 3
        %s171 = scalar_select %p170, %s169, 3
        %s172 = smul.addr %s171, 8
        %s173 = scalar_lea.vmem %s0, %s172
        %p174 = pneg %p38
        %p175 = pneg %p35
        %s176 = smul.u32 2, %s17
        %p177 = scmp.lt.s32.totalorder %s176, 3
        %s178 = scalar_select %p177, %s176, 3
        %s179 = smul.addr %s178, 8
        %s180 = scalar_lea.vmem %s1, %s179
        %p181 = pneg %p64
        %p182 = pneg %p61
        %s183 = smul.u32 2, %s17
        %p184 = scmp.lt.s32.totalorder %s183, 3
        %s185 = scalar_select %p184, %s183, 3
        %s186 = smul.addr %s185, 8
        %s187 = scalar_lea.vmem %s2, %s186
        %p188 = pneg %p90
        %p189 = pneg %p87
        %p190 = pneg %p116
        %p191 = pneg %p113
        %s192 = sand.u32 %s103, 1
        %s193 = scalar_lea.sflag [#allocation3], %s192
        %s194 = sand.u32 %s103, 1
        %s195 = smul.addr %s194, 8
        %s196 = scalar_lea.vmem [#allocation2], %s195
        %s197 = smul.u32 2, %s17
        %p198 = scmp.lt.s32.totalorder %s197, 3
        %s199 = scalar_select %p198, %s197, 3
        %s200 = smul.addr %s199, 8
        %s201 = scalar_lea.vmem %s0, %s200
        %s202 = smul.u32 2, %s17
        %s203 = smul.u32 2, %s17
        %p204 = scmp.lt.s32.totalorder %s203, 3
        %s205 = scalar_select %p204, %s203, 3
        %s206 = smul.addr %s205, 8
        %s207 = scalar_lea.vmem %s1, %s206
        %s208 = smul.u32 2, %s17
        %s209 = smul.u32 2, %s17
        %p210 = scmp.lt.s32.totalorder %s209, 3
        %s211 = scalar_select %p210, %s209, 3
        %s212 = smul.addr %s211, 8
        %s213 = scalar_lea.vmem %s2, %s212
        %s214 = smul.u32 2, %s17
        %v215 = vld [vmem:[%s201] sm:$0xff]
        %v216 = vld [vmem:[%s201 + $0x8] sm:$0xff]
        %v217 = vld [vmem:[%s207] sm:$0xff]
        %v218 = vld [vmem:[%s207 + $0x8] sm:$0xff]
        %v219 = vld [vmem:[%s213] sm:$0xff]
        %v220 = vld [vmem:[%s213 + $0x8] sm:$0xff]
        %v221 = vlaneseq
        %v222 = vand.u32 %v221, 127
        %223 = vset.pattern.permute.xlu0 0
        %224 = vperm.xlu0 %223, %v217
        %v225 = vpop.permute.xlu0 %224
        %226 = vset.pattern.permute.xlu0 0
        %227 = vperm.xlu0 %226, %v218
        %v228 = vpop.permute.xlu0 %227
        %vm229 = vcmp.eq.s32.totalorder %v222, %v225
        %vm230 = vcmp.eq.s32.totalorder %v222, %v228
        %v231 = vsel %vm229, %v215, 0.0
        %v232 = vsel %vm230, %v216, 0.0
        %vm233 = vcmask 130048
        %v234 = vsel %vm233, %v231, 0.0
        %235 = vadd.xlane.f32.xlu0 %v234
        %v236 = vpop.xlane.xlu0 %235
        %v237 = vsel %vm233, %v232, 0.0
        %238 = vadd.xlane.f32.xlu0 %v237
        %v239 = vpop.xlane.xlu0 %238
        %v240 = vsel %vm233, %v215, -inf
        %241 = vmax.xlane.f32.xlu0 %v240
        %v242 = vpop.xlane.xlu0 %241
        %v243 = vsel %vm233, %v216, -inf
        %244 = vmax.xlane.f32.xlu0 %v243
        %v245 = vpop.xlane.xlu0 %244
        %v246 = vsub.f32 %v215, %v242
        %v247 = vsub.f32 %v216, %v245
        %v248 = vmul.f32 %v246, 1.442695
        %v249 = vpow.pop %v248
        %v250 = vmul.f32 %v247, 1.442695
        %v251 = vpow.pop %v250
        %v252 = vsel %vm233, %v249, 0.0
        %253 = vadd.xlane.f32.xlu0 %v252
        %v254 = vpop.xlane.xlu0 %253
        %v255 = vsel %vm233, %v251, 0.0
        %256 = vadd.xlane.f32.xlu0 %v255
        %v257 = vpop.xlane.xlu0 %256
        %v258 = vlog2.pop %v254
        %v259 = vmul.f32 %v258, 0.6931472
        %v260 = vlog2.pop %v257
        %v261 = vmul.f32 %v260, 0.6931472
        %v262 = vadd.f32 %v242, %v259
        %v263 = vadd.f32 %v245, %v261
        %v264 = vsub.f32 %v262, %v236
        %v265 = vsub.f32 %v263, %v239
        %v266 = vsub.f32 0.0, %v264
        %v267 = vsub.f32 0.0, %v265
        %v268 = vmul.f32 %v266, 1.442695
        %v269 = vpow.pop %v268
        %v270 = vmul.f32 %v267, 1.442695
        %v271 = vpow.pop %v270
        %v272 = vsub.f32 1.0, %v269
        %v273 = vsub.f32 1.0, %v271
        %v274 = vmax.f32 %v272, 0.0
        %v275 = vmax.f32 %v273, 0.0
        %v276 = vmul.f32 %v274, %v274
        %v277 = vmul.f32 %v275, %v275
        %v278 = vmul.f32 %v274, %v276
        %v279 = vmul.f32 %v275, %v277
        %v280 = vmul.f32 %v219, %v278
        %v281 = vmul.f32 %v220, %v279
        %v282 = vmul.f32 %v280, %v264
        %v283 = vmul.f32 %v281, %v265
        %s284 = smul.u32 %s17, 16
        %v285 = vlaneseq
        %v286 = vshrl.u32 %v285, 7
        %v287 = vadd.s32 %v286, 8
        %v288 = vstv %s284
        %v289 = vadd.s32 %v288, %v286
        %v290 = vadd.s32 %v288, %v287
        %vm291 = vcmp.lt.s32.totalorder %v289, 29
        %vm292 = vcmp.lt.s32.totalorder %v290, 29
        %v293 = vsel %vm291, %v282, 0.0
        %v294 = vsel %vm292, %v283, 0.0
        %vm295 = vcmask 7168
        %v296 = vsel %vm295, %v293, 0.0
        %v297 = vsel %vm295, %v294, 0.0
        %v298 = vadd.f32 %v296, %v297
        %v299 = vrot.slane %v298, 4
        %v300 = vadd.f32 %v298, %v299
        %v301 = vrot.slane %v300, 2
        %v302 = vadd.f32 %v300, %v301
        %v303 = vrot.slane %v302, 1
        %v304 = vadd.f32 %v302, %v303
        %306 = vset.pattern.permute.xlu0 0
        %307 = vperm.xlu0 %306, %v304
        %v308 = vpop.permute.xlu0 %307
        %310 = vst [vmem:[%s196] sm:$0xff] %v308
        %s311 = sand.u32 %s103, 1
        %s312 = scalar_lea.sflag [#allocation3], %s311
        %s313 = sand.u32 %s103, 1
        %s314 = smul.addr %s313, 8
        %s315 = scalar_lea.vmem [#allocation2], %s314
        // Predicated region
        $region33: #{tpu_custom_call.1} parent=31 // pred_check
          %p316 = pneg %p113
        $region34: #{tpu_custom_call.1} parent=31 // pred_check_branch
          %318 = sbr.rel (%p316) target = $region36
        $region35: #{tpu_custom_call.1} parent=31 // pred_region
          %320 = vsyncadd %s312, 0
          %s321 = smul.addr %s17, 8
          %s322 = scalar_lea.hbm %s3, %s321
          %s324 = sshll.u32 %s315, 4
          %s325 = int_to_ptr.vmem [resolvable:$true] %s324
          %s326 = sshll.u32 %s322, 4
          %s327 = int_to_ptr.hbm [resolvable:$true] %s326
          %329 = dma.vmem_to_hbm [thread:$0]  %s325, 128, %s327, %s312
        $region36: #{tpu_custom_call.1} parent=31 // pred_fallthru
          _
      $region32: #{tpu_custom_call.1} parent=5 // pred_fallthru
        _
      %p330 = scmp.le.s32.totalorder 2, %s12
      // Predicated region
      $region37: #{tpu_custom_call.1} parent=5 // pred_check
        %p331 = pneg %p330
      $region38: #{tpu_custom_call.1} parent=5 // pred_check_branch
        %333 = sbr.rel (%p331) target = $region40
      $region39: #{tpu_custom_call.1} parent=5 // pred_region
        %s334 = ssub.s32 %s12, 2
        // Predicated region
        $region41: #{tpu_custom_call.1} parent=39 // pred_check
          %p335 = pneg %p119
        $region42: #{tpu_custom_call.1} parent=39 // pred_check_branch
          %337 = sbr.rel (%p335) target = $region44
        $region43: #{tpu_custom_call.1} parent=39 // pred_region
          %s338 = sand.u32 %s104, 1
          %s339 = scalar_lea.sflag [#allocation3], %s338
          %s340 = sand.u32 %s104, 1
          %s341 = smul.addr %s340, 8
          %s342 = scalar_lea.vmem [#allocation2], %s341
          %344 = dma.done %s339, 128
        $region44: #{tpu_custom_call.1} parent=39 // pred_fallthru
          _
      $region40: #{tpu_custom_call.1} parent=5 // pred_fallthru
        _
    $region6: #{tpu_custom_call.1} parent=1 // loop_footer
      %s16 = sadd.s32 1, %s12
    $region7: #{tpu_custom_call.1} parent=1 // loop_footer_branch
      %11 = sbr.rel target = $region3
    $region8: #{tpu_custom_call.1} parent=1 // loop_exit
      _
    %345 = vsyncpa [#allocation3], 1
    %s346 = scalar_lea.sflag [#allocation3], 1
    %347 = vsyncpa %s346, 1

</llo_original>
